<compile_context>
chip_gen: v7x
topology: tpu7x:2x2x1
jax: 0.10.0
libtpu: 0.0.40
codegen_flags: <defaults>
</compile_context>

<pallas_src>
import functools

import jax
import jax.numpy as jnp
from jax import lax
from jax.experimental import pallas as pl
from jax.experimental.pallas import tpu as pltpu

EPS = 1e-12  # F.normalize default eps


def _rmsnorm_kernel(x_ref, g_ref, o_ref, *, scale):
    # x_ref: (TR, D) tile of rows; g_ref: (1, D) gamma; o_ref: (TR, D)
    x = x_ref[...].astype(jnp.float32)
    ss = jnp.sum(x * x, axis=-1, keepdims=True)            # (TR, 1) cross-lane reduce (XLU)
    # max(sqrt(ss), eps) == sqrt(max(ss, eps^2)) -> single EUP rsqrt, scale folded in.
    inv = scale * lax.rsqrt(jnp.maximum(ss, EPS * EPS))     # (TR, 1)
    g = g_ref[...].astype(jnp.float32)                      # (1, D), broadcasts over rows
    o_ref[...] = ((x * inv) * g).astype(o_ref.dtype)


def _choose_row_tile(num_rows, dim, itemsize):
    """Dtype-aware row tile: big enough to amortize ~0.35us/grid-step overhead,
    small enough that 2 x (input tile + output tile) stays <= ~32 MiB."""
    pack = max(8, 32 // itemsize)                           # sublane pack: 8 f32, 16 bf16, 32 i8
    budget = 32 * 1024 * 1024                               # bytes for double-buffered in+out tiles
    max_rows = max(pack, budget // (4 * dim * itemsize))
    tile = min(1024, max_rows)
    if tile >= num_rows:
        return num_rows                                     # single block == full row extent (always legal)
    return max(pack, (tile // pack) * pack)                 # pack-aligned; ragged last block is masked


def rmsnorm(x, gamma, *, row_tile=None):
    """Apply RMSNorm over the last axis of x. gamma has shape (D,)."""
    orig_shape = x.shape
    D = orig_shape[-1]
    scale = float(D) ** 0.5

    x2 = x.reshape(-1, D)
    R = x2.shape[0]
    if row_tile is None:
        row_tile = _choose_row_tile(R, D, jnp.dtype(x.dtype).itemsize)

    gamma2 = gamma.reshape(1, D)

    out = pl.pallas_call(
        functools.partial(_rmsnorm_kernel, scale=scale),
        out_shape=jax.ShapeDtypeStruct((R, D), x.dtype),
        grid_spec=pltpu.PrefetchScalarGridSpec(
            num_scalar_prefetch=0,
            grid=(pl.cdiv(R, row_tile),),
            in_specs=[
                pl.BlockSpec((row_tile, D), lambda i: (i, 0)),
                pl.BlockSpec((1, D), lambda i: (0, 0)),
            ],
            out_specs=pl.BlockSpec((row_tile, D), lambda i: (i, 0)),
        ),
        compiler_params=pltpu.CompilerParams(
            dimension_semantics=("parallel",),
            vmem_limit_bytes=48 * 1024 * 1024,
        ),
    )(x2, gamma2)

    return out.reshape(orig_shape)


def rmsnorm_ref(x, gamma):
    xf = x.astype(jnp.float32)
    norm = jnp.sqrt(jnp.sum(xf * xf, axis=-1, keepdims=True))
    scale = float(x.shape[-1]) ** 0.5
    return (xf / jnp.maximum(norm, EPS) * scale * gamma.astype(jnp.float32)).astype(x.dtype)


if __name__ == "__main__":
    key = jax.random.PRNGKey(0)

    # Small shape consistent with the module's forward: (B, S, D).
    B, S, D = 2, 8, 32
    x = jax.random.normal(key, (B, S, D), dtype=jnp.float32)
    gamma = jnp.ones((D,), dtype=jnp.float32)  # nn.Parameter(torch.ones(dim))

    out = jax.block_until_ready(rmsnorm(x, gamma))
    ref = rmsnorm_ref(x, gamma)
    assert out.shape == x.shape and out.dtype == x.dtype
    assert jnp.allclose(out, ref, atol=1e-5, rtol=1e-5), "mismatch vs reference (small case)"

    # Exercise the ragged-last-block path (no wrapper padding): R=300 rows,
    # forced row_tile=128 -> grid of 3 with a 44-row partial final block.
    x2 = jax.random.normal(jax.random.PRNGKey(0), (1, 300, 256), dtype=jnp.float32)
    g2 = jax.random.normal(jax.random.PRNGKey(1), (256,), dtype=jnp.float32)
    out2 = jax.block_until_ready(rmsnorm(x2, g2, row_tile=128))
    ref2 = rmsnorm_ref(x2, g2)
    assert jnp.allclose(out2, ref2, atol=1e-5, rtol=1e-5), "mismatch vs reference (ragged case)"

    # Non-trivial gamma + bf16 path (sublane pack 16, dtype-aware tile).
    xb = jax.random.normal(jax.random.PRNGKey(2), (4, 512, 512), dtype=jnp.bfloat16)
    gb = jax.random.normal(jax.random.PRNGKey(3), (512,), dtype=jnp.bfloat16)
    outb = jax.block_until_ready(rmsnorm(xb, gb))
    refb = rmsnorm_ref(xb, gb)
    assert jnp.allclose(outb.astype(jnp.float32), refb.astype(jnp.float32),
                        atol=2e-2, rtol=2e-2), "mismatch vs reference (bf16 case)"

    print("KERNEL_OK")
</pallas_src>

<mosaic_0001>
module attributes {stable_mosaic.version = 11 : i64} {
  func.func @_rmsnorm_kernel(%arg0: i32, %arg1: memref<16x32xf32, #tpu.memory_space<vmem>>, %arg2: memref<1x32xf32, #tpu.memory_space<vmem>>, %arg3: memref<16x32xf32, #tpu.memory_space<vmem>>) attributes {dimension_semantics = [#tpu.dimension_semantics<parallel>], iteration_bounds = array<i64: 1>, scalar_prefetch = 0 : i64, scratch_operands = 0 : i64, tpu.core_type = #tpu.core_type<tc>, window_params = [{transform_indices = @transform_0, window_bounds = array<i64: 16, 32>}, {pipeline_mode = #tpu.pipeline_mode<synchronous>, transform_indices = @transform_1, window_bounds = array<i64: 1, 32>}, {transform_indices = @transform_2, window_bounds = array<i64: 16, 32>}]} {
    %c0 = arith.constant 0 : index
    %c0_0 = arith.constant 0 : index
    %0 = vector.load %arg1[%c0, %c0_0] : memref<16x32xf32, #tpu.memory_space<vmem>>, vector<16x32xf32>
    %1 = arith.mulf %0, %0 : vector<16x32xf32>
    %cst = arith.constant dense<0.000000e+00> : vector<16xf32>
    %2 = vector.multi_reduction <add>, %1, %cst [1] : vector<16x32xf32> to vector<16xf32>
    %3 = vector.shape_cast %2 : vector<16xf32> to vector<16x1xf32>
    %cst_1 = arith.constant 1.000000e-24 : f32
    %4 = vector.broadcast %cst_1 : f32 to vector<16x1xf32>
    %5 = arith.maximumf %3, %4 : vector<16x1xf32>
    %6 = math.rsqrt %5 : vector<16x1xf32>
    %cst_2 = arith.constant 5.65685415 : f32
    %7 = vector.broadcast %cst_2 : f32 to vector<16x1xf32>
    %8 = arith.mulf %7, %6 : vector<16x1xf32>
    %c0_3 = arith.constant 0 : index
    %c0_4 = arith.constant 0 : index
    %9 = vector.load %arg2[%c0_3, %c0_4] : memref<1x32xf32, #tpu.memory_space<vmem>>, vector<1x32xf32>
    %10 = vector.broadcast %8 : vector<16x1xf32> to vector<16x32xf32>
    %11 = arith.mulf %0, %10 : vector<16x32xf32>
    %12 = vector.broadcast %9 : vector<1x32xf32> to vector<16x32xf32>
    %13 = arith.mulf %11, %12 : vector<16x32xf32>
    %c0_5 = arith.constant 0 : index
    %c0_6 = arith.constant 0 : index
    %14 = vector.load %arg3[%c0_5, %c0_6] : memref<16x32xf32, #tpu.memory_space<vmem>>, vector<16x32xf32>
    tpu.vector_store %arg3[%c0_5, %c0_6], %13 {strides = array<i32>} : memref<16x32xf32, #tpu.memory_space<vmem>>, vector<16x32xf32>,
    return
  }
  func.func @transform_0(%arg0: i32) -> (i32, i32) {
    %c0_i32 = arith.constant 0 : i32
    %c0_i32_0 = arith.constant 0 : i32
    return %arg0, %c0_i32 : i32, i32
  }
  func.func @transform_1(%arg0: i32) -> (i32, i32) {
    %c0_i32 = arith.constant 0 : i32
    %c0_i32_0 = arith.constant 0 : i32
    %c0_i32_1 = arith.constant 0 : i32
    return %c0_i32, %c0_i32_0 : i32, i32
  }
  func.func @transform_2(%arg0: i32) -> (i32, i32) {
    %c0_i32 = arith.constant 0 : i32
    %c0_i32_0 = arith.constant 0 : i32
    return %arg0, %c0_i32 : i32, i32
  }
}

</mosaic_0001>

<llo_original>
// kernel: tpu_custom_call.1
$region0: #{tpu_custom_call.1}
  #allocation0 [shape = 'u32[]', space=smem, size = 0x4, offset = 0x4, fixed_abs, tag = 'smem constant byte address 0x4 - core index']
  #allocation1 [shape = 'u32[144,128]{1,0:T(1,128)}', space=vmem, size = 0x12000, scoped, tag = 'internal scratch']
  %s0 = inlined_call_operand.hbm [shape: f32[16,32], index: 0, kind: input, shape index: {}]
  %s1 = inlined_call_operand.vmem [shape: f32[1,32], index: 1, kind: input, shape index: {}]
  %s2 = inlined_call_operand.hbm [shape: f32[16,32], index: 2, kind: output, shape index: {}]
  %s3 = sld [smem:[#allocation0]]
  $region22: #{tpu_custom_call.1} parent=0
    _
  %s5 = ssub.s32 1, %s3
  %s6 = scalar_select 0, %s5, %s3
  $region1: #{tpu_custom_call.1} parent=0
    #allocation2 [shape = 'u8[8192]{0}', space=vmem, size = 0x2000, scoped, tag = 'input window, operand 0, single buffered']
    #allocation3 [shape = 's32[1]{0}', space=sflag, size = 0x4, scoped, tag = 'scoped memory for tpu_custom_call.1']
    #allocation4 [shape = 's32[1]{0}', space=sflag, size = 0x4, scoped, tag = 'scoped memory for tpu_custom_call.1']
    #allocation5 [shape = 'u8[8192]{0}', space=vmem, size = 0x2000, scoped, tag = 'output window, operand 0, single buffered']
    %7 = vsyncpa [#allocation3], 0
    %8 = vsyncpa [#allocation4], 0
    // Predicated region
    $region2: #{tpu_custom_call.1} parent=1 // pred_check
      _
    $region3: #{tpu_custom_call.1} parent=1 // pred_check_branch
      %10 = sbr.rel (0) target = $region5
    $region4: #{tpu_custom_call.1} parent=1 // pred_region
      %s12 = ssub.s32 256, 256
      %13 = vsyncadd [#allocation3], %s12
      %s14 = sshll.u32 [#allocation2], 4
      %s15 = int_to_ptr.vmem [resolvable:$true] %s14
      %20 = dma.hbm_to_vmem [thread:$0]  %s0, 256, %s15, [#allocation3], 128, 128, 8
    $region5: #{tpu_custom_call.1} parent=1 // pred_fallthru
      _
    // Predicated region
    $region6: #{tpu_custom_call.1} parent=1 // pred_check
      _
    $region7: #{tpu_custom_call.1} parent=1 // pred_check_branch
      %22 = sbr.rel (0) target = $region9
    $region8: #{tpu_custom_call.1} parent=1 // pred_region
      _
    $region9: #{tpu_custom_call.1} parent=1 // pred_fallthru
      _
    // Predicated region
    $region10: #{tpu_custom_call.1} parent=1 // pred_check
      _
    $region11: #{tpu_custom_call.1} parent=1 // pred_check_branch
      %24 = sbr.rel (0) target = $region13
    $region12: #{tpu_custom_call.1} parent=1 // pred_region
      %25 = dma.done [#allocation3], 256
    $region13: #{tpu_custom_call.1} parent=1 // pred_fallthru
      _
    %v26 = vld [vmem:[#allocation2] sm:$0xff]
    %v27 = vld [vmem:[#allocation2 + $0x8] sm:$0xff]
    %v28 = vmul.f32 %v26, %v26
    %v29 = vmul.f32 %v27, %v27
    %vm30 = vcmask 261120
    %v31 = vsel %vm30, %v28, 0.0
    %32 = vadd.xlane.f32.xlu0 %v31
    %v33 = vpop.xlane.xlu0 %32
    %v34 = vsel %vm30, %v29, 0.0
    %35 = vadd.xlane.f32.xlu0 %v34
    %v36 = vpop.xlane.xlu0 %35
    %v37 = vmax.f32 %v33, 1e-24
    %v38 = vmax.f32 %v36, 1e-24
    %v39 = vrsqrt.pop %v37
    %v40 = vrsqrt.pop %v38
    %v41 = vmul.f32 %v39, 5.656854
    %v42 = vmul.f32 %v40, 5.656854
    %v43 = vld [vmem:[%s1] sm:$0x1]
    %v44 = vmul.f32 %v26, %v41
    %v45 = vmul.f32 %v27, %v42
    %v47 = vlaneseq
    %v48 = vshrl.u32 %v47, 7
    %v49 = vsub.s32 0, %v48
    %v50 = vrot.slane %v43, %v49
    %v52 = vmul.f32 %v44, %v50
    %v53 = vmul.f32 %v45, %v50
    %54 = vst.msk [vmem:[#allocation5] sm:$0xff] %vm30, %v52
    %55 = vst.msk [vmem:[#allocation5 + $0x8] sm:$0xff] %vm30, %v53
    // Predicated region
    $region14: #{tpu_custom_call.1} parent=1 // pred_check
      _
    $region15: #{tpu_custom_call.1} parent=1 // pred_check_branch
      %57 = sbr.rel (0) target = $region17
    $region16: #{tpu_custom_call.1} parent=1 // pred_region
      %s59 = ssub.s32 256, 256
      %60 = vsyncadd [#allocation4], %s59
      %s61 = sshll.u32 [#allocation5], 4
      %s62 = int_to_ptr.vmem [resolvable:$true] %s61
      %67 = dma.vmem_to_hbm [thread:$0]  %s62, 256, %s2, [#allocation4], 128, 128, 8
    $region17: #{tpu_custom_call.1} parent=1 // pred_fallthru
      _
    // Predicated region
    $region18: #{tpu_custom_call.1} parent=1 // pred_check
      _
    $region19: #{tpu_custom_call.1} parent=1 // pred_check_branch
      %69 = sbr.rel (0) target = $region21
    $region20: #{tpu_custom_call.1} parent=1 // pred_region
      %70 = dma.done [#allocation4], 256
    $region21: #{tpu_custom_call.1} parent=1 // pred_fallthru
      _
    %71 = vsyncpa [#allocation3], 1
    %72 = vsyncpa [#allocation4], 1

</llo_original>
